<compile_context>
chip_gen: v6e
topology: v6e:2x2x1
jax: 0.10.0
libtpu: 0.0.40
codegen_flags: <defaults>
</compile_context>

<pallas_src>
import jax
import jax.numpy as jnp
from jax.experimental import pallas as pl
from jax.experimental.pallas import tpu as pltpu

B = 4              # number of independent graphs (batched along the grid)
N = 8              # nodes per graph ("batch" of BatchNorm1d)
INPUT_DIM = 16
HIDDEN_DIM = 32
OUTPUT_DIM = 16
NUM_STEPS = 1      # PWGGNN default
BN_EPS = 1e-5      # nn.BatchNorm1d default eps

# ---- packed parameter slab layout (all row offsets are multiples of 8) ----
LANES = 2 * HIDDEN_DIM        # 64 lanes
R_I2H = 0                     # [16, 32]  fc_i2h^T
R_FIO = 16                    # [32, 64]  (w_in^T | w_out^T)
R_XA = 48                     # [32, 64]  x2i^T rows for the `ain` half
R_XB = 80                     # [32, 64]  x2i^T rows for the `aout` half
R_HH = 112                    # [32, 64]  h2h^T
R_H2O = 144                   # [32, 16]  fc_h2o^T
R_VEC = 176                   # rows: gamma, beta, (b_in|b_out), bx
SLAB_ROWS = 184               # padded to a multiple of 8


def pack_params(p):
    """Pack all weights/biases into one [SLAB_ROWS, 64] f32 slab (host side)."""
    H = HIDDEN_DIM
    slab = jnp.zeros((SLAB_ROWS, LANES), jnp.float32)
    slab = slab.at[R_I2H:R_I2H + INPUT_DIM, :H].set(p["w_i2h"].T)
    slab = slab.at[R_FIO:R_FIO + H, :].set(
        jnp.concatenate([p["w_in"].T, p["w_out"].T], axis=1))
    wxT = p["wx"].T                               # [2H(in), 2H(out)]
    slab = slab.at[R_XA:R_XA + H, :].set(wxT[:H, :])
    slab = slab.at[R_XB:R_XB + H, :].set(wxT[H:, :])
    slab = slab.at[R_HH:R_HH + H, :].set(p["wh"].T)
    slab = slab.at[R_H2O:R_H2O + H, :OUTPUT_DIM].set(p["w_h2o"].T)
    slab = slab.at[R_VEC + 0, :INPUT_DIM].set(p["gamma"])
    slab = slab.at[R_VEC + 1, :INPUT_DIM].set(p["beta"])
    slab = slab.at[R_VEC + 2, :].set(jnp.concatenate([p["b_in"], p["b_out"]]))
    slab = slab.at[R_VEC + 3, :].set(p["bx"])
    return slab


def pwggnn_kernel(feat_ref, a_in_ref, a_out_ref, slab_ref, out_ref):
    f32 = jnp.float32
    H = HIDDEN_DIM

    # ---- weight views from the packed slab (static slices, no transposes) ----
    w_i2h = slab_ref[R_I2H:R_I2H + INPUT_DIM, :H]        # [16, 32]
    w_fio = slab_ref[R_FIO:R_FIO + H, :]                 # [32, 64]
    wx_a = slab_ref[R_XA:R_XA + H, :]                    # [32, 64]
    wx_b = slab_ref[R_XB:R_XB + H, :]                    # [32, 64]
    w_hh = slab_ref[R_HH:R_HH + H, :]                    # [32, 64]
    w_h2o = slab_ref[R_H2O:R_H2O + H, :OUTPUT_DIM]       # [32, 16]

    # Hoisted vector operands (loaded once, reused across NUM_STEPS).
    vec = slab_ref[R_VEC:R_VEC + 8, :]                   # [8, 64]
    gamma = vec[0:1, :INPUT_DIM]                         # [1, 16]
    beta = vec[1:2, :INPUT_DIM]                          # [1, 16]
    b_fio = vec[2:3, :]                                  # [1, 64]
    bx = vec[3:4, :]                                     # [1, 64]

    feat = feat_ref[0]                                   # [N, INPUT_DIM]
    a_in = a_in_ref[0]                                   # [N, N]
    a_out = a_out_ref[0]                                 # [N, N]

    # ---- BatchNorm1d (training-mode batch statistics, biased variance) ----
    mean = jnp.mean(feat, axis=0, keepdims=True)
    var = jnp.mean((feat - mean) ** 2, axis=0, keepdims=True)
    feat = (feat - mean) * jax.lax.rsqrt(var + BN_EPS)
    feat = feat * gamma + beta

    # ---- fc_i2h (bias=False since input_dim != hidden_dim) ----
    h = jnp.dot(feat, w_i2h, preferred_element_type=f32)          # [N, H]

    # ---- propagate, NUM_STEPS times (fused matmuls, f32 MXU accumulation) ----
    for _ in range(NUM_STEPS):
        # feat_in | feat_out in one MXU pass.
        fio = jnp.dot(h, w_fio, preferred_element_type=f32) + b_fio  # [N, 2H]
        fi = fio[:, :H]
        fo = fio[:, H:]

        # dgl u_mul_e_sum:  a_in[v] = sum_u A_in[v, u] * feat_in[u]
        ain = jnp.dot(a_in, fi, preferred_element_type=f32)          # [N, H]
        aout = jnp.dot(a_out, fo, preferred_element_type=f32)        # [N, H]

        # UpdateCell: x2i(cat(ain, aout)) + h2h(h), each as full-width passes.
        xi = (jnp.dot(ain, wx_a, preferred_element_type=f32)
              + jnp.dot(aout, wx_b, preferred_element_type=f32)
              + bx)                                                   # [N, 2H]
        hh = jnp.dot(h, w_hh, preferred_element_type=f32)             # [N, 2H]

        g = xi + hh
        input_gate = jax.nn.sigmoid(g[:, :H])
        new_gate = jnp.tanh(g[:, H:])
        h = new_gate + input_gate * (h - new_gate)

    # ---- fc_h2o (bias=False since hidden_dim != output_dim); activation=None ----
    out_ref[0] = jnp.dot(h, w_h2o, preferred_element_type=f32)


def pwggnn_forward(feat, a_in, a_out, slab):
    """feat [B,N,Din], a_in/a_out [B,N,N], slab [SLAB_ROWS,64] -> [B,N,Dout]."""
    Bn = feat.shape[0]
    return pl.pallas_call(
        pwggnn_kernel,
        out_shape=jax.ShapeDtypeStruct((Bn, N, OUTPUT_DIM), jnp.float32),
        grid=(Bn,),
        in_specs=[
            pl.BlockSpec((1, N, INPUT_DIM), lambda b: (b, 0, 0)),
            pl.BlockSpec((1, N, N), lambda b: (b, 0, 0)),
            pl.BlockSpec((1, N, N), lambda b: (b, 0, 0)),
            # Parameter slab: same block for every grid step -> VMEM-resident.
            pl.BlockSpec((SLAB_ROWS, LANES), lambda b: (0, 0)),
        ],
        out_specs=pl.BlockSpec((1, N, OUTPUT_DIM), lambda b: (b, 0, 0)),
        compiler_params=pltpu.CompilerParams(
            dimension_semantics=("parallel",)),   # lets v7x shard batch on 2 TCs
    )(feat, a_in, a_out, slab)


def pwggnn_reference(feat, a_in, a_out, p):
    """Pure-JAX reference for ONE graph, mirroring the PyTorch module exactly."""
    H = HIDDEN_DIM
    mean = feat.mean(0, keepdims=True)
    var = ((feat - mean) ** 2).mean(0, keepdims=True)
    x = (feat - mean) / jnp.sqrt(var + BN_EPS) * p["gamma"] + p["beta"]
    h = x @ p["w_i2h"].T
    for _ in range(NUM_STEPS):
        fi = h @ p["w_in"].T + p["b_in"]
        fo = h @ p["w_out"].T + p["b_out"]
        a = jnp.concatenate([a_in @ fi, a_out @ fo], axis=1)
        xi = a @ p["wx"].T + p["bx"]
        hh = h @ p["wh"].T
        gate = jax.nn.sigmoid(xi[:, :H] + hh[:, :H])
        new = jnp.tanh(xi[:, H:] + hh[:, H:])
        h = new + gate * (h - new)
    return h @ p["w_h2o"].T


if __name__ == "__main__":
    key = jax.random.PRNGKey(0)
    ks = jax.random.split(key, 16)
    H, Din, Dout = HIDDEN_DIM, INPUT_DIM, OUTPUT_DIM

    # Batched node features and dense weighted adjacency matrices.
    feat = jax.random.normal(ks[0], (B, N, Din), jnp.float32)
    mask_in = (jax.random.uniform(ks[1], (B, N, N)) < 0.4).astype(jnp.float32)
    mask_out = (jax.random.uniform(ks[2], (B, N, N)) < 0.4).astype(jnp.float32)
    a_in = jax.random.uniform(ks[3], (B, N, N), jnp.float32) * mask_in    # g  'iw'
    a_out = jax.random.uniform(ks[4], (B, N, N), jnp.float32) * mask_out  # rg 'ow'

    s = 0.1
    params = {
        "gamma": 1.0 + s * jax.random.normal(ks[5], (Din,), jnp.float32),
        "beta": s * jax.random.normal(ks[6], (Din,), jnp.float32),
        "w_i2h": s * jax.random.normal(ks[7], (H, Din), jnp.float32),      # Linear(Din,H, bias=False)
        "w_in": s * jax.random.normal(ks[8], (H, H), jnp.float32),         # Linear(H,H)
        "b_in": s * jax.random.normal(ks[9], (H,), jnp.float32),
        "w_out": s * jax.random.normal(ks[10], (H, H), jnp.float32),       # Linear(H,H)
        "b_out": s * jax.random.normal(ks[11], (H,), jnp.float32),
        "wx": s * jax.random.normal(ks[12], (2 * H, 2 * H), jnp.float32),  # UpdateCell.x2i
        "bx": s * jax.random.normal(ks[13], (2 * H,), jnp.float32),
        "wh": s * jax.random.normal(ks[14], (2 * H, H), jnp.float32),      # UpdateCell.h2h (no bias)
        "w_h2o": s * jax.random.normal(ks[15], (Dout, H), jnp.float32),    # Linear(H,Dout, bias=False)
    }
    # NOTE: weights stay f32 here so the result matches the f32 reference bit-for-
    # bit within 1e-3; a bf16 cast of the slab is a further DMA/MXU win if looser
    # tolerance is acceptable.
    slab = pack_params(params)

    out = pwggnn_forward(feat, a_in, a_out, slab)
    jax.block_until_ready(out)

    ref = jax.vmap(lambda f, ai, ao: pwggnn_reference(f, ai, ao, params))(
        feat, a_in, a_out)
    assert out.shape == (B, N, Dout) and out.dtype == jnp.float32
    assert jnp.allclose(out, ref, rtol=1e-3, atol=1e-3), "mismatch vs reference"

    print("KERNEL_OK")
</pallas_src>

<mosaic_0001>
module attributes {stable_mosaic.version = 11 : i64} {
  func.func @pwggnn_kernel(%arg0: i32, %arg1: memref<1x8x16xf32, #tpu.memory_space<vmem>>, %arg2: memref<1x8x8xf32, #tpu.memory_space<vmem>>, %arg3: memref<1x8x8xf32, #tpu.memory_space<vmem>>, %arg4: memref<184x64xf32, #tpu.memory_space<vmem>>, %arg5: memref<1x8x16xf32, #tpu.memory_space<vmem>>) attributes {dimension_semantics = [#tpu.dimension_semantics<parallel>], iteration_bounds = array<i64: 4>, scalar_prefetch = 0 : i64, scratch_operands = 0 : i64, tpu.core_type = #tpu.core_type<tc>, window_params = [{transform_indices = @transform_0, window_bounds = array<i64: 1, 8, 16>}, {transform_indices = @transform_1, window_bounds = array<i64: 1, 8, 8>}, {transform_indices = @transform_2, window_bounds = array<i64: 1, 8, 8>}, {pipeline_mode = #tpu.pipeline_mode<synchronous>, transform_indices = @transform_3, window_bounds = array<i64: 184, 64>}, {transform_indices = @transform_4, window_bounds = array<i64: 1, 8, 16>}]} {
    %c0 = arith.constant 0 : index
    %c0_0 = arith.constant 0 : index
    %0 = vector.load %arg4[%c0, %c0_0] : memref<184x64xf32, #tpu.memory_space<vmem>>, vector<16x32xf32>
    %c16 = arith.constant 16 : index
    %c0_1 = arith.constant 0 : index
    %1 = vector.load %arg4[%c16, %c0_1] : memref<184x64xf32, #tpu.memory_space<vmem>>, vector<32x64xf32>
    %c48 = arith.constant 48 : index
    %c0_2 = arith.constant 0 : index
    %2 = vector.load %arg4[%c48, %c0_2] : memref<184x64xf32, #tpu.memory_space<vmem>>, vector<32x64xf32>
    %c80 = arith.constant 80 : index
    %c0_3 = arith.constant 0 : index
    %3 = vector.load %arg4[%c80, %c0_3] : memref<184x64xf32, #tpu.memory_space<vmem>>, vector<32x64xf32>
    %c112 = arith.constant 112 : index
    %c0_4 = arith.constant 0 : index
    %4 = vector.load %arg4[%c112, %c0_4] : memref<184x64xf32, #tpu.memory_space<vmem>>, vector<32x64xf32>
    %c144 = arith.constant 144 : index
    %c0_5 = arith.constant 0 : index
    %5 = vector.load %arg4[%c144, %c0_5] : memref<184x64xf32, #tpu.memory_space<vmem>>, vector<32x16xf32>
    %c176 = arith.constant 176 : index
    %c0_6 = arith.constant 0 : index
    %6 = vector.load %arg4[%c176, %c0_6] : memref<184x64xf32, #tpu.memory_space<vmem>>, vector<8x64xf32>
    %7 = vector.extract_strided_slice %6 {offsets = [0, 0], sizes = [1, 16], strides = [1, 1]} : vector<8x64xf32> to vector<1x16xf32>
    %8 = vector.extract_strided_slice %6 {offsets = [1, 0], sizes = [1, 16], strides = [1, 1]} : vector<8x64xf32> to vector<1x16xf32>
    %9 = vector.extract_strided_slice %6 {offsets = [2, 0], sizes = [1, 64], strides = [1, 1]} : vector<8x64xf32> to vector<1x64xf32>
    %10 = vector.extract_strided_slice %6 {offsets = [3, 0], sizes = [1, 64], strides = [1, 1]} : vector<8x64xf32> to vector<1x64xf32>
    %c0_7 = arith.constant 0 : index
    %c0_8 = arith.constant 0 : index
    %c0_9 = arith.constant 0 : index
    %11 = vector.load %arg1[%c0_7, %c0_8, %c0_9] : memref<1x8x16xf32, #tpu.memory_space<vmem>>, vector<1x8x16xf32>
    %12 = vector.shape_cast %11 : vector<1x8x16xf32> to vector<8x16xf32>
    %c0_10 = arith.constant 0 : index
    %c0_11 = arith.constant 0 : index
    %c0_12 = arith.constant 0 : index
    %13 = vector.load %arg2[%c0_10, %c0_11, %c0_12] : memref<1x8x8xf32, #tpu.memory_space<vmem>>, vector<1x8x8xf32>
    %14 = vector.shape_cast %13 : vector<1x8x8xf32> to vector<8x8xf32>
    %c0_13 = arith.constant 0 : index
    %c0_14 = arith.constant 0 : index
    %c0_15 = arith.constant 0 : index
    %15 = vector.load %arg3[%c0_13, %c0_14, %c0_15] : memref<1x8x8xf32, #tpu.memory_space<vmem>>, vector<1x8x8xf32>
    %16 = vector.shape_cast %15 : vector<1x8x8xf32> to vector<8x8xf32>
    %cst = arith.constant dense<0.000000e+00> : vector<16xf32>
    %17 = vector.multi_reduction <add>, %12, %cst [0] : vector<8x16xf32> to vector<16xf32>
    %18 = vector.shape_cast %17 : vector<16xf32> to vector<1x16xf32>
    %cst_16 = arith.constant 8.000000e+00 : f32
    %19 = vector.broadcast %cst_16 : f32 to vector<1x16xf32>
    %20 = arith.divf %18, %19 : vector<1x16xf32>
    %21 = vector.broadcast %20 : vector<1x16xf32> to vector<8x16xf32>
    %22 = arith.subf %12, %21 : vector<8x16xf32>
    %23 = arith.mulf %22, %22 : vector<8x16xf32>
    %cst_17 = arith.constant dense<0.000000e+00> : vector<16xf32>
    %24 = vector.multi_reduction <add>, %23, %cst_17 [0] : vector<8x16xf32> to vector<16xf32>
    %25 = vector.shape_cast %24 : vector<16xf32> to vector<1x16xf32>
    %cst_18 = arith.constant 8.000000e+00 : f32
    %26 = vector.broadcast %cst_18 : f32 to vector<1x16xf32>
    %27 = arith.divf %25, %26 : vector<1x16xf32>
    %28 = vector.broadcast %20 : vector<1x16xf32> to vector<8x16xf32>
    %29 = arith.subf %12, %28 : vector<8x16xf32>
    %cst_19 = arith.constant 9.99999974E-6 : f32
    %30 = vector.broadcast %cst_19 : f32 to vector<1x16xf32>
    %31 = arith.addf %27, %30 : vector<1x16xf32>
    %32 = math.rsqrt %31 : vector<1x16xf32>
    %33 = vector.broadcast %32 : vector<1x16xf32> to vector<8x16xf32>
    %34 = arith.mulf %29, %33 : vector<8x16xf32>
    %35 = vector.broadcast %7 : vector<1x16xf32> to vector<8x16xf32>
    %36 = arith.mulf %34, %35 : vector<8x16xf32>
    %37 = vector.broadcast %8 : vector<1x16xf32> to vector<8x16xf32>
    %38 = arith.addf %36, %37 : vector<8x16xf32>
    %cst_20 = arith.constant dense<0.000000e+00> : vector<8x32xf32>
    %39 = tpu.matmul %38, %0, %cst_20 {dimension_numbers = #tpu.dot_dimension_numbers<[1], [0], [0], [1], [0, 0, 1, 1], [], []>} : vector<8x16xf32>, vector<16x32xf32>, vector<8x32xf32> -> vector<8x32xf32>
    %cst_21 = arith.constant dense<0.000000e+00> : vector<8x64xf32>
    %40 = tpu.matmul %39, %1, %cst_21 {dimension_numbers = #tpu.dot_dimension_numbers<[1], [0], [0], [1], [0, 0, 1, 1], [], []>} : vector<8x32xf32>, vector<32x64xf32>, vector<8x64xf32> -> vector<8x64xf32>
    %41 = vector.broadcast %9 : vector<1x64xf32> to vector<8x64xf32>
    %42 = arith.addf %40, %41 : vector<8x64xf32>
    %43 = vector.extract_strided_slice %42 {offsets = [0, 0], sizes = [8, 32], strides = [1, 1]} : vector<8x64xf32> to vector<8x32xf32>
    %44 = vector.extract_strided_slice %42 {offsets = [0, 32], sizes = [8, 32], strides = [1, 1]} : vector<8x64xf32> to vector<8x32xf32>
    %cst_22 = arith.constant dense<0.000000e+00> : vector<8x32xf32>
    %45 = tpu.matmul %14, %43, %cst_22 {dimension_numbers = #tpu.dot_dimension_numbers<[1], [0], [0], [1], [0, 0, 1, 1], [], []>} : vector<8x8xf32>, vector<8x32xf32>, vector<8x32xf32> -> vector<8x32xf32>
    %cst_23 = arith.constant dense<0.000000e+00> : vector<8x32xf32>
    %46 = tpu.matmul %16, %44, %cst_23 {dimension_numbers = #tpu.dot_dimension_numbers<[1], [0], [0], [1], [0, 0, 1, 1], [], []>} : vector<8x8xf32>, vector<8x32xf32>, vector<8x32xf32> -> vector<8x32xf32>
    %cst_24 = arith.constant dense<0.000000e+00> : vector<8x64xf32>
    %47 = tpu.matmul %45, %2, %cst_24 {dimension_numbers = #tpu.dot_dimension_numbers<[1], [0], [0], [1], [0, 0, 1, 1], [], []>} : vector<8x32xf32>, vector<32x64xf32>, vector<8x64xf32> -> vector<8x64xf32>
    %cst_25 = arith.constant dense<0.000000e+00> : vector<8x64xf32>
    %48 = tpu.matmul %46, %3, %cst_25 {dimension_numbers = #tpu.dot_dimension_numbers<[1], [0], [0], [1], [0, 0, 1, 1], [], []>} : vector<8x32xf32>, vector<32x64xf32>, vector<8x64xf32> -> vector<8x64xf32>
    %49 = arith.addf %47, %48 : vector<8x64xf32>
    %50 = vector.broadcast %10 : vector<1x64xf32> to vector<8x64xf32>
    %51 = arith.addf %49, %50 : vector<8x64xf32>
    %cst_26 = arith.constant dense<0.000000e+00> : vector<8x64xf32>
    %52 = tpu.matmul %39, %4, %cst_26 {dimension_numbers = #tpu.dot_dimension_numbers<[1], [0], [0], [1], [0, 0, 1, 1], [], []>} : vector<8x32xf32>, vector<32x64xf32>, vector<8x64xf32> -> vector<8x64xf32>
    %53 = arith.addf %51, %52 : vector<8x64xf32>
    %54 = vector.extract_strided_slice %53 {offsets = [0, 0], sizes = [8, 32], strides = [1, 1]} : vector<8x64xf32> to vector<8x32xf32>
    %55 = arith.negf %54 : vector<8x32xf32>
    %56 = math.exp %55 : vector<8x32xf32>
    %cst_27 = arith.constant 1.000000e+00 : f32
    %57 = vector.broadcast %cst_27 : f32 to vector<8x32xf32>
    %58 = arith.addf %57, %56 : vector<8x32xf32>
    %59 = arith.divf %57, %58 : vector<8x32xf32>
    %60 = vector.extract_strided_slice %53 {offsets = [0, 32], sizes = [8, 32], strides = [1, 1]} : vector<8x64xf32> to vector<8x32xf32>
    %61 = math.tanh %60 : vector<8x32xf32>
    %62 = arith.subf %39, %61 : vector<8x32xf32>
    %63 = arith.mulf %59, %62 : vector<8x32xf32>
    %64 = arith.addf %61, %63 : vector<8x32xf32>
    %cst_28 = arith.constant dense<0.000000e+00> : vector<8x16xf32>
    %65 = tpu.matmul %64, %5, %cst_28 {dimension_numbers = #tpu.dot_dimension_numbers<[1], [0], [0], [1], [0, 0, 1, 1], [], []>} : vector<8x32xf32>, vector<32x16xf32>, vector<8x16xf32> -> vector<8x16xf32>
    %c0_29 = arith.constant 0 : index
    %c0_30 = arith.constant 0 : index
    %c0_31 = arith.constant 0 : index
    %66 = vector.load %arg5[%c0_29, %c0_30, %c0_31] : memref<1x8x16xf32, #tpu.memory_space<vmem>>, vector<1x8x16xf32>
    %67 = vector.shape_cast %66 : vector<1x8x16xf32> to vector<8x16xf32>
    %68 = vector.shape_cast %65 : vector<8x16xf32> to vector<1x8x16xf32>
    tpu.vector_store %arg5[%c0_29, %c0_30, %c0_31], %68 {strides = array<i32>} : memref<1x8x16xf32, #tpu.memory_space<vmem>>, vector<1x8x16xf32>,
    return
  }
  func.func @transform_0(%arg0: i32) -> (i32, i32, i32) {
    %c0_i32 = arith.constant 0 : i32
    %c0_i32_0 = arith.constant 0 : i32
    %c0_i32_1 = arith.constant 0 : i32
    return %arg0, %c0_i32, %c0_i32_0 : i32, i32, i32
  }
  func.func @transform_1(%arg0: i32) -> (i32, i32, i32) {
    %c0_i32 = arith.constant 0 : i32
    %c0_i32_0 = arith.constant 0 : i32
    %c0_i32_1 = arith.constant 0 : i32
    return %arg0, %c0_i32, %c0_i32_0 : i32, i32, i32
  }
  func.func @transform_2(%arg0: i32) -> (i32, i32, i32) {
    %c0_i32 = arith.constant 0 : i32
    %c0_i32_0 = arith.constant 0 : i32
    %c0_i32_1 = arith.constant 0 : i32
    return %arg0, %c0_i32, %c0_i32_0 : i32, i32, i32
  }
  func.func @transform_3(%arg0: i32) -> (i32, i32) {
    %c0_i32 = arith.constant 0 : i32
    %c0_i32_0 = arith.constant 0 : i32
    %c0_i32_1 = arith.constant 0 : i32
    return %c0_i32, %c0_i32_0 : i32, i32
  }
  func.func @transform_4(%arg0: i32) -> (i32, i32, i32) {
    %c0_i32 = arith.constant 0 : i32
    %c0_i32_0 = arith.constant 0 : i32
    %c0_i32_1 = arith.constant 0 : i32
    return %arg0, %c0_i32, %c0_i32_0 : i32, i32, i32
  }
}

</mosaic_0001>

<llo_original>
// kernel: tpu_custom_call.1
$region0: #{tpu_custom_call.1}
  #allocation0 [shape = 'u32[]', space=smem, size = 0x4, offset = 0x4, fixed_abs, tag = 'smem constant byte address 0x4 - core index']
  #allocation1 [shape = 'u32[144,128]{1,0:T(1,128)}', space=vmem, size = 0x12000, scoped, tag = 'internal scratch']
  %s0 = inlined_call_operand.vmem [shape: f32[4,8,16], index: 0, kind: input, shape index: {}]
  %s1 = inlined_call_operand.vmem [shape: f32[4,8,8], index: 1, kind: input, shape index: {}]
  %s2 = inlined_call_operand.vmem [shape: f32[4,8,8], index: 2, kind: input, shape index: {}]
  %s3 = inlined_call_operand.vmem [shape: f32[184,64], index: 3, kind: input, shape index: {}]
  %s4 = inlined_call_operand.hbm [shape: f32[4,8,16], index: 4, kind: output, shape index: {}]
  %s5 = sld [smem:[#allocation0]]
  $region49: #{tpu_custom_call.1} parent=0
    _
  %s7 = ssub.s32 1, %s5
  %s8 = scalar_select 0, %s7, %s5
  $region1: #{tpu_custom_call.1} parent=0
    #allocation2 [shape = 'u8[8192]{0}', space=vmem, size = 0x2000, scoped, tag = 'output window, operand 0']
    #allocation3 [shape = 's32[2]{0}', space=sflag, size = 0x8, scoped, tag = 'scoped memory for tpu_custom_call.1']
    %9 = vsyncpa [#allocation3], 0
    %s10 = scalar_lea.sflag [#allocation3], 1
    %11 = vsyncpa %s10, 0
    loop: start=0, step=1, limit=6
    $region2: #{tpu_custom_call.1} parent=1 // loop_pre_header
      _
    $region3: #{tpu_custom_call.1} parent=1 // loop_header
      %s13 = sphi 0, %s17
      %p14 = scmp.ge.s32.totalorder %s13, 6
      %s23 = sphi 0, %s25
      %s26 = sphi 0, %s23
      %s27 = sphi 0, %s26
      %s43 = sphi 0, %s27
      %s49 = sphi 0, %s51
      %s52 = sphi 0, %s49
      %s53 = sphi 0, %s52
      %s69 = sphi 0, %s53
      %s75 = sphi 0, %s77
      %s78 = sphi 0, %s75
      %s79 = sphi 0, %s78
      %s95 = sphi 0, %s79
      %s99 = sphi 0, %s99
      %s101 = sphi 0, %s99
      %s102 = sphi 0, %s101
      %s116 = sphi 0, %s102
      %s122 = sphi 0, %s124
      %s125 = sphi 0, %s122
      %s126 = sphi 0, %s125
      %s142 = sphi 0, %s126
    $region4: #{tpu_custom_call.1} parent=1 // loop_header_branch
      %16 = sbr.rel (%p14) target = $region8
    $region5: #{tpu_custom_call.1} parent=1 // loop_body
      %s18 = ssub.s32 %s13, 1
      %s19 = ssub.s32 %s13, 2
      %s20 = sadd.s32 %s13, 1
      %s21 = ssub.s32 %s13, %s20
      %p22 = scmp.eq.s32.totalorder %s21, 0
      %s24 = sadd.s32 %s23, 1
      %s25 = scalar_select %p22, %s23, %s24
      %p28 = pneg %p22
      %p29 = scmp.eq.s32.totalorder %s13, 3
      %p30 = por %p28, %p29
      %p31 = scmp.ne.s32.totalorder %s23, %s26
      %p32 = scmp.eq.s32.totalorder %s13, 0
      %p33 = por %p31, %p32
      %p34 = scmp.ne.s32.totalorder %s23, %s26
      %p35 = scmp.eq.s32.totalorder %s18, 3
      %p36 = por %p34, %p35
      %p37 = scmp.ne.s32.totalorder %s26, %s27
      %p38 = scmp.eq.s32.totalorder %s18, 0
      %p39 = por %p37, %p38
      %p40 = scmp.ne.s32.totalorder %s26, %s27
      %p41 = scmp.eq.s32.totalorder %s19, 3
      %p42 = por %p40, %p41
      %p44 = scmp.ne.s32.totalorder %s27, %s43
      %p45 = scmp.eq.s32.totalorder %s19, 0
      %p46 = por %p44, %p45
      %s47 = ssub.s32 %s13, %s20
      %p48 = scmp.eq.s32.totalorder %s47, 0
      %s50 = sadd.s32 %s49, 1
      %s51 = scalar_select %p48, %s49, %s50
      %p54 = pneg %p48
      %p55 = scmp.eq.s32.totalorder %s13, 3
      %p56 = por %p54, %p55
      %p57 = scmp.ne.s32.totalorder %s49, %s52
      %p58 = scmp.eq.s32.totalorder %s13, 0
      %p59 = por %p57, %p58
      %p60 = scmp.ne.s32.totalorder %s49, %s52
      %p61 = scmp.eq.s32.totalorder %s18, 3
      %p62 = por %p60, %p61
      %p63 = scmp.ne.s32.totalorder %s52, %s53
      %p64 = scmp.eq.s32.totalorder %s18, 0
      %p65 = por %p63, %p64
      %p66 = scmp.ne.s32.totalorder %s52, %s53
      %p67 = scmp.eq.s32.totalorder %s19, 3
      %p68 = por %p66, %p67
      %p70 = scmp.ne.s32.totalorder %s53, %s69
      %p71 = scmp.eq.s32.totalorder %s19, 0
      %p72 = por %p70, %p71
      %s73 = ssub.s32 %s13, %s20
      %p74 = scmp.eq.s32.totalorder %s73, 0
      %s76 = sadd.s32 %s75, 1
      %s77 = scalar_select %p74, %s75, %s76
      %p80 = pneg %p74
      %p81 = scmp.eq.s32.totalorder %s13, 3
      %p82 = por %p80, %p81
      %p83 = scmp.ne.s32.totalorder %s75, %s78
      %p84 = scmp.eq.s32.totalorder %s13, 0
      %p85 = por %p83, %p84
      %p86 = scmp.ne.s32.totalorder %s75, %s78
      %p87 = scmp.eq.s32.totalorder %s18, 3
      %p88 = por %p86, %p87
      %p89 = scmp.ne.s32.totalorder %s78, %s79
      %p90 = scmp.eq.s32.totalorder %s18, 0
      %p91 = por %p89, %p90
      %p92 = scmp.ne.s32.totalorder %s78, %s79
      %p93 = scmp.eq.s32.totalorder %s19, 3
      %p94 = por %p92, %p93
      %p96 = scmp.ne.s32.totalorder %s79, %s95
      %p97 = scmp.eq.s32.totalorder %s19, 0
      %p98 = por %p96, %p97
      %s100 = sadd.s32 %s99, 1
      %p103 = scmp.eq.s32.totalorder %s13, 3
      %p104 = scmp.ne.s32.totalorder %s99, %s101
      %p105 = scmp.eq.s32.totalorder %s13, 0
      %p106 = por %p104, %p105
      %p107 = scmp.ne.s32.totalorder %s99, %s101
      %p108 = scmp.eq.s32.totalorder %s18, 3
      %p109 = por %p107, %p108
      %p110 = scmp.ne.s32.totalorder %s101, %s102
      %p111 = scmp.eq.s32.totalorder %s18, 0
      %p112 = por %p110, %p111
      %p113 = scmp.ne.s32.totalorder %s101, %s102
      %p114 = scmp.eq.s32.totalorder %s19, 3
      %p115 = por %p113, %p114
      %p117 = scmp.ne.s32.totalorder %s102, %s116
      %p118 = scmp.eq.s32.totalorder %s19, 0
      %p119 = por %p117, %p118
      %s120 = ssub.s32 %s13, %s20
      %p121 = scmp.eq.s32.totalorder %s120, 0
      %s123 = sadd.s32 %s122, 1
      %s124 = scalar_select %p121, %s122, %s123
      %p127 = pneg %p121
      %p128 = scmp.eq.s32.totalorder %s13, 3
      %p129 = por %p127, %p128
      %p130 = scmp.ne.s32.totalorder %s122, %s125
      %p131 = scmp.eq.s32.totalorder %s13, 0
      %p132 = por %p130, %p131
      %p133 = scmp.ne.s32.totalorder %s122, %s125
      %p134 = scmp.eq.s32.totalorder %s18, 3
      %p135 = por %p133, %p134
      %p136 = scmp.ne.s32.totalorder %s125, %s126
      %p137 = scmp.eq.s32.totalorder %s18, 0
      %p138 = por %p136, %p137
      %p139 = scmp.ne.s32.totalorder %s125, %s126
      %p140 = scmp.eq.s32.totalorder %s19, 3
      %p141 = por %p139, %p140
      %p143 = scmp.ne.s32.totalorder %s126, %s142
      %p144 = scmp.eq.s32.totalorder %s19, 0
      %p145 = por %p143, %p144
      %p146 = scmp.le.s32.totalorder 1, %s13
      %p147 = scmp.lt.s32.totalorder %s13, 5
      %p148 = pnand %p146, %p147
      %p149 = pneg %p148
      // Predicated region
      $region9: #{tpu_custom_call.1} parent=5 // pred_check
        _
      $region10: #{tpu_custom_call.1} parent=5 // pred_check_branch
        %151 = sbr.rel (%p148) target = $region12
      $region11: #{tpu_custom_call.1} parent=5 // pred_region
        %s152 = ssub.s32 %s13, 1
        // Predicated region
        $region13: #{tpu_custom_call.1} parent=11 // pred_check
          %p153 = pneg %p112
        $region14: #{tpu_custom_call.1} parent=11 // pred_check_branch
          %155 = sbr.rel (%p153) target = $region16
        $region15: #{tpu_custom_call.1} parent=11 // pred_region
          _
        $region16: #{tpu_custom_call.1} parent=11 // pred_fallthru
          _
      $region12: #{tpu_custom_call.1} parent=5 // pred_fallthru
        _
      %p156 = scmp.lt.s32.totalorder %s13, 4
      // Predicated region
      $region17: #{tpu_custom_call.1} parent=5 // pred_check
        %p157 = pneg %p156
      $region18: #{tpu_custom_call.1} parent=5 // pred_check_branch
        %159 = sbr.rel (%p157) target = $region20
      $region19: #{tpu_custom_call.1} parent=5 // pred_region
        // Predicated region
        $region21: #{tpu_custom_call.1} parent=19 // pred_check
          %p160 = pneg %p33
        $region22: #{tpu_custom_call.1} parent=19 // pred_check_branch
          %162 = sbr.rel (%p160) target = $region24
        $region23: #{tpu_custom_call.1} parent=19 // pred_region
          %p163 = scmp.lt.s32.totalorder %s13, 3
          %s164 = scalar_select %p163, %s13, 3
          %s165 = smul.addr %s164, 8
          %s166 = scalar_lea.vmem %s0, %s165
        $region24: #{tpu_custom_call.1} parent=19 // pred_fallthru
          _
        // Predicated region
        $region25: #{tpu_custom_call.1} parent=19 // pred_check
          %p167 = pneg %p59
        $region26: #{tpu_custom_call.1} parent=19 // pred_check_branch
          %169 = sbr.rel (%p167) target = $region28
        $region27: #{tpu_custom_call.1} parent=19 // pred_region
          %p170 = scmp.lt.s32.totalorder %s13, 3
          %s171 = scalar_select %p170, %s13, 3
          %s172 = smul.addr %s171, 8
          %s173 = scalar_lea.vmem %s1, %s172
        $region28: #{tpu_custom_call.1} parent=19 // pred_fallthru
          _
        // Predicated region
        $region29: #{tpu_custom_call.1} parent=19 // pred_check
          %p174 = pneg %p85
        $region30: #{tpu_custom_call.1} parent=19 // pred_check_branch
          %176 = sbr.rel (%p174) target = $region32
        $region31: #{tpu_custom_call.1} parent=19 // pred_region
          %p177 = scmp.lt.s32.totalorder %s13, 3
          %s178 = scalar_select %p177, %s13, 3
          %s179 = smul.addr %s178, 8
          %s180 = scalar_lea.vmem %s2, %s179
        $region32: #{tpu_custom_call.1} parent=19 // pred_fallthru
          _
      $region20: #{tpu_custom_call.1} parent=5 // pred_fallthru
        _
      %p181 = scmp.le.s32.totalorder 1, %s13
      %p182 = scmp.lt.s32.totalorder %s13, 5
      %p183 = pnand %p181, %p182
      %p184 = pneg %p183
      // Predicated region
      $region33: #{tpu_custom_call.1} parent=5 // pred_check
        _
      $region34: #{tpu_custom_call.1} parent=5 // pred_check_branch
        %186 = sbr.rel (%p183) target = $region36
      $region35: #{tpu_custom_call.1} parent=5 // pred_region
        %s187 = ssub.s32 %s13, 1
        %p188 = scmp.lt.s32.totalorder %s18, 3
        %s189 = scalar_select %p188, %s18, 3
        %s190 = smul.addr %s189, 8
        %s191 = scalar_lea.vmem %s0, %s190
        %p192 = pneg %p39
        %p193 = pneg %p36
        %p194 = scmp.lt.s32.totalorder %s18, 3
        %s195 = scalar_select %p194, %s18, 3
        %s196 = smul.addr %s195, 8
        %s197 = scalar_lea.vmem %s1, %s196
        %p198 = pneg %p65
        %p199 = pneg %p62
        %p200 = scmp.lt.s32.totalorder %s18, 3
        %s201 = scalar_select %p200, %s18, 3
        %s202 = smul.addr %s201, 8
        %s203 = scalar_lea.vmem %s2, %s202
        %p204 = pneg %p91
        %p205 = pneg %p88
        %p206 = pneg %p112
        %p207 = pneg %p109
        %p208 = pneg %p138
        %p209 = pneg %p135
        %s210 = sand.u32 %s125, 1
        %s211 = scalar_lea.sflag [#allocation3], %s210
        %s212 = sand.u32 %s125, 1
        %s213 = smul.addr %s212, 8
        %s214 = scalar_lea.vmem [#allocation2], %s213
        %p215 = scmp.lt.s32.totalorder %s18, 3
        %s216 = scalar_select %p215, %s18, 3
        %s217 = smul.addr %s216, 8
        %s218 = scalar_lea.vmem %s0, %s217
        %p219 = scmp.lt.s32.totalorder %s18, 3
        %s220 = scalar_select %p219, %s18, 3
        %s221 = smul.addr %s220, 8
        %s222 = scalar_lea.vmem %s1, %s221
        %p223 = scmp.lt.s32.totalorder %s18, 3
        %s224 = scalar_select %p223, %s18, 3
        %s225 = smul.addr %s224, 8
        %s226 = scalar_lea.vmem %s2, %s225
        %v227 = vld [vmem:[%s3] sm:$0xff]
        %v228 = vld [vmem:[%s3 + $0x8] sm:$0xff]
        %v229 = vld [vmem:[%s3 + $0x10] sm:$0xff]
        %v230 = vld [vmem:[%s3 + $0x18] sm:$0xff]
        %v231 = vld [vmem:[%s3 + $0x20] sm:$0xff]
        %v232 = vld [vmem:[%s3 + $0x28] sm:$0xff]
        %v233 = vld [vmem:[%s3 + $0x30] sm:$0xff]
        %v234 = vld [vmem:[%s3 + $0x38] sm:$0xff]
        %v235 = vld [vmem:[%s3 + $0x40] sm:$0xff]
        %v236 = vld [vmem:[%s3 + $0x48] sm:$0xff]
        %v237 = vld [vmem:[%s3 + $0x50] sm:$0xff]
        %v238 = vld [vmem:[%s3 + $0x58] sm:$0xff]
        %v239 = vld [vmem:[%s3 + $0x60] sm:$0xff]
        %v240 = vld [vmem:[%s3 + $0x68] sm:$0xff]
        %v241 = vld [vmem:[%s3 + $0x70] sm:$0xff]
        %v242 = vld [vmem:[%s3 + $0x78] sm:$0xff]
        %v243 = vld [vmem:[%s3 + $0x80] sm:$0xff]
        %v244 = vld [vmem:[%s3 + $0x88] sm:$0xff]
        %v245 = vld [vmem:[%s3 + $0x90] sm:$0xff]
        %v246 = vld [vmem:[%s3 + $0x98] sm:$0xff]
        %v247 = vld [vmem:[%s3 + $0xa0] sm:$0xff]
        %v248 = vld [vmem:[%s3 + $0xa8] sm:$0xff]
        %v249 = vld [vmem:[%s3 + $0xb0] sm:$0xff]
        %v250 = vld [vmem:[%s218] sm:$0xff]
        %v251 = vld [vmem:[%s222] sm:$0xff]
        %v252 = vld [vmem:[%s226] sm:$0xff]
        %vm253 = vcmask 130048
        %v254 = vsel %vm253, %v250, 0.0
        %v255 = vrot.slane %v254, 4
        %v256 = vadd.f32 %v254, %v255
        %v257 = vrot.slane %v256, 2
        %v258 = vadd.f32 %v256, %v257
        %v259 = vrot.slane %v258, 1
        %v260 = vadd.f32 %v258, %v259
        %v261 = vrcp.pop 8.0
        %v262 = vmul.f32 %v260, %v261
        %v263 = vsub.f32 %v250, %v262
        %v264 = vmul.f32 %v263, %v263
        %v265 = vsel %vm253, %v264, 0.0
        %v266 = vrot.slane %v265, 4
        %v267 = vadd.f32 %v265, %v266
        %v268 = vrot.slane %v267, 2
        %v269 = vadd.f32 %v267, %v268
        %v270 = vrot.slane %v269, 1
        %v271 = vadd.f32 %v269, %v270
        %v272 = vmul.f32 %v271, %v261
        %v273 = vadd.f32 %v272, 1e-05
        %v274 = vrsqrt.pop %v273
        %v275 = vmul.f32 %v263, %v274
        %v276 = vlaneseq
        %v277 = vshrl.u32 %v276, 7
        %v278 = vsub.s32 0, %v277
        %v279 = vrot.slane %v249, %v278
        %v280 = vmul.f32 %v275, %v279
        %v281 = vlaneseq
        %v282 = vshrl.u32 %v281, 7
        %v283 = vsub.s32 1, %v282
        %v284 = vrot.slane %v249, %v283
        %v285 = vadd.f32 %v280, %v284
        %v287 = vsel %vm253, %v285, 0
        %289 = vmatprep.subr.mxu0 0.0
        %290 = vmatpush1.msra.mxu0 0.0
        %291 = vmatprep.subr.mxu0 0.0
        %292 = vmatpush1.msra.mxu0 0.0
        %293 = vmatprep.subr.mxu0 0.0
        %294 = vmatpush1.msra.mxu0 0.0
        %295 = vmatprep.subr.mxu0 0.0
        %296 = vmatpush1.msra.mxu0 0.0
        %297 = vmatprep.subr.mxu0 0.0
        %298 = vmatpush1.msra.mxu0 0.0
        %299 = vmatprep.subr.mxu0 0.0
        %300 = vmatpush1.msra.mxu0 0.0
        %301 = vmatprep.subr.mxu0 0.0
        %302 = vmatpush1.msra.mxu0 0.0
        %303 = vmatprep.subr.mxu0 0.0
        %304 = vmatpush1.msra.mxu0 0.0
        %305 = vmatprep.subr.mxu0 0.0
        %306 = vmatpush1.msra.mxu0 0.0
        %307 = vmatprep.subr.mxu0 0.0
        %308 = vmatpush1.msra.mxu0 0.0
        %309 = vmatprep.subr.mxu0 0.0
        %310 = vmatpush1.msra.mxu0 0.0
        %311 = vmatprep.subr.mxu0 0.0
        %312 = vmatpush1.msra.mxu0 0.0
        %313 = vmatprep.subr.mxu0 0.0
        %314 = vmatpush1.msra.mxu0 0.0
        %315 = vmatprep.subr.mxu0 0.0
        %316 = vmatpush1.msra.mxu0 0.0
        %317 = vmatprep.subr.mxu0 0.0
        %318 = vmatpush1.msra.mxu0 %v228
        %319 = vmatprep.subr.mxu0 0.0
        %320 = vmatpush1.msra.mxu0 %v227
        %321 = vmatprep.subr.mxu0 0.0
        %322 = vmatpush2.msra.mxu0 0.0
        %323 = vmatprep.subr.mxu0 0.0
        %324 = vmatpush2.msra.mxu0 0.0
        %325 = vmatprep.subr.mxu0 0.0
        %326 = vmatpush2.msra.mxu0 0.0
        %327 = vmatprep.subr.mxu0 0.0
        %328 = vmatpush2.msra.mxu0 0.0
        %329 = vmatprep.subr.mxu0 0.0
        %330 = vmatpush2.msra.mxu0 0.0
        %331 = vmatprep.subr.mxu0 0.0
        %332 = vmatpush2.msra.mxu0 0.0
        %333 = vmatprep.subr.mxu0 0.0
        %334 = vmatpush2.msra.mxu0 0.0
        %335 = vmatprep.subr.mxu0 0.0
        %336 = vmatpush2.msra.mxu0 0.0
        %337 = vmatprep.subr.mxu0 0.0
        %338 = vmatpush2.msra.mxu0 0.0
        %339 = vmatprep.subr.mxu0 0.0
        %340 = vmatpush2.msra.mxu0 0.0
        %341 = vmatprep.subr.mxu0 0.0
        %342 = vmatpush2.msra.mxu0 0.0
        %343 = vmatprep.subr.mxu0 0.0
        %344 = vmatpush2.msra.mxu0 0.0
        %345 = vmatprep.subr.mxu0 0.0
        %346 = vmatpush2.msra.mxu0 0.0
        %347 = vmatprep.subr.mxu0 0.0
        %348 = vmatpush2.msra.mxu0 0.0
        %349 = vmatprep.subr.mxu0 0.0
        %350 = vmatpush2.msra.mxu0 0.0
        %351 = vmatprep.subr.mxu0 0.0
        %352 = vmatpush2.msra.mxu0 0.0
        %353 = vmatprep.mubr.f32.mxu0 0.0
        %354 = vmatmul.mubr.f32.gmra.mxu0 %v287
        %v355 = vpop.f32.mrf.mxu0
        %v356 = vadd.f32 0.0, %v355
        %v357 = vpop.f32.mrf.mxu0
        %358 = vdwg.mxu0
        %v359 = vlaneseq
        %v360 = vshrl.u32 %v359, 7
        %v361 = vsub.s32 2, %v360
        %v362 = vrot.slane %v249, %v361
        %vm363 = vcmask 261120
        %v365 = vsel %vm363, %v356, 0
        %367 = vmatprep.subr.mxu0 0.0
        %368 = vmatpush1.msra.mxu0 0.0
        %369 = vmatprep.subr.mxu0 0.0
        %370 = vmatpush1.msra.mxu0 0.0
        %371 = vmatprep.subr.mxu0 0.0
        %372 = vmatpush1.msra.mxu0 0.0
        %373 = vmatprep.subr.mxu0 0.0
        %374 = vmatpush1.msra.mxu0 0.0
        %375 = vmatprep.subr.mxu0 0.0
        %376 = vmatpush1.msra.mxu0 0.0
        %377 = vmatprep.subr.mxu0 0.0
        %378 = vmatpush1.msra.mxu0 0.0
        %379 = vmatprep.subr.mxu0 0.0
        %380 = vmatpush1.msra.mxu0 0.0
        %381 = vmatprep.subr.mxu0 0.0
        %382 = vmatpush1.msra.mxu0 0.0
        %383 = vmatprep.subr.mxu0 0.0
        %384 = vmatpush1.msra.mxu0 0.0
        %385 = vmatprep.subr.mxu0 0.0
        %386 = vmatpush1.msra.mxu0 0.0
        %387 = vmatprep.subr.mxu0 0.0
        %388 = vmatpush1.msra.mxu0 0.0
        %389 = vmatprep.subr.mxu0 0.0
        %390 = vmatpush1.msra.mxu0 0.0
        %391 = vmatprep.subr.mxu0 0.0
        %392 = vmatpush1.msra.mxu0 %v232
        %393 = vmatprep.subr.mxu0 0.0
        %394 = vmatpush1.msra.mxu0 %v231
        %395 = vmatprep.subr.mxu0 0.0
        %396 = vmatpush1.msra.mxu0 %v230
        %397 = vmatprep.subr.mxu0 0.0
        %398 = vmatpush1.msra.mxu0 %v229
        %399 = vmatprep.subr.mxu0 0.0
        %400 = vmatpush2.msra.mxu0 0.0
        %401 = vmatprep.subr.mxu0 0.0
        %402 = vmatpush2.msra.mxu0 0.0
        %403 = vmatprep.subr.mxu0 0.0
        %404 = vmatpush2.msra.mxu0 0.0
        %405 = vmatprep.subr.mxu0 0.0
        %406 = vmatpush2.msra.mxu0 0.0
        %407 = vmatprep.subr.mxu0 0.0
        %408 = vmatpush2.msra.mxu0 0.0
        %409 = vmatprep.subr.mxu0 0.0
        %410 = vmatpush2.msra.mxu0 0.0
        %411 = vmatprep.subr.mxu0 0.0
        %412 = vmatpush2.msra.mxu0 0.0
        %413 = vmatprep.subr.mxu0 0.0
        %414 = vmatpush2.msra.mxu0 0.0
        %415 = vmatprep.subr.mxu0 0.0
        %416 = vmatpush2.msra.mxu0 0.0
        %417 = vmatprep.subr.mxu0 0.0
        %418 = vmatpush2.msra.mxu0 0.0
        %419 = vmatprep.subr.mxu0 0.0
        %420 = vmatpush2.msra.mxu0 0.0
        %421 = vmatprep.subr.mxu0 0.0
        %422 = vmatpush2.msra.mxu0 0.0
        %423 = vmatprep.subr.mxu0 0.0
        %424 = vmatpush2.msra.mxu0 0.0
        %425 = vmatprep.subr.mxu0 0.0
        %426 = vmatpush2.msra.mxu0 0.0
        %427 = vmatprep.subr.mxu0 0.0
        %428 = vmatpush2.msra.mxu0 0.0
        %429 = vmatprep.subr.mxu0 0.0
        %430 = vmatpush2.msra.mxu0 0.0
        %431 = vmatprep.mubr.f32.mxu0 0.0
        %432 = vmatmul.mubr.f32.gmra.mxu0 %v365
        %v433 = vpop.f32.mrf.mxu0
        %v434 = vadd.f32 %v362, %v433
        %v435 = vpop.f32.mrf.mxu0
        %436 = vdwg.mxu0
        %vm437 = vcmask 64512
        %v439 = vsel %vm437, %v251, 0
        %441 = vmatprep.subr.mxu0 0.0
        %442 = vmatpush1.msra.mxu0 0.0
        %443 = vmatprep.subr.mxu0 0.0
        %444 = vmatpush1.msra.mxu0 0.0
        %445 = vmatprep.subr.mxu0 0.0
        %446 = vmatpush1.msra.mxu0 0.0
        %447 = vmatprep.subr.mxu0 0.0
        %448 = vmatpush1.msra.mxu0 0.0
        %449 = vmatprep.subr.mxu0 0.0
        %450 = vmatpush1.msra.mxu0 0.0
        %451 = vmatprep.subr.mxu0 0.0
        %452 = vmatpush1.msra.mxu0 0.0
        %453 = vmatprep.subr.mxu0 0.0
        %454 = vmatpush1.msra.mxu0 0.0
        %455 = vmatprep.subr.mxu0 0.0
        %456 = vmatpush1.msra.mxu0 0.0
        %457 = vmatprep.subr.mxu0 0.0
        %458 = vmatpush1.msra.mxu0 0.0
        %459 = vmatprep.subr.mxu0 0.0
        %460 = vmatpush1.msra.mxu0 0.0
        %461 = vmatprep.subr.mxu0 0.0
        %462 = vmatpush1.msra.mxu0 0.0
        %463 = vmatprep.subr.mxu0 0.0
        %464 = vmatpush1.msra.mxu0 0.0
        %465 = vmatprep.subr.mxu0 0.0
        %466 = vmatpush1.msra.mxu0 0.0
        %467 = vmatprep.subr.mxu0 0.0
        %468 = vmatpush1.msra.mxu0 0.0
        %469 = vmatprep.subr.mxu0 0.0
        %470 = vmatpush1.msra.mxu0 0.0
        %471 = vmatprep.subr.mxu0 0.0
        %472 = vmatpush1.msra.mxu0 %v434
        %473 = vmatprep.subr.mxu0 0.0
        %474 = vmatpush2.msra.mxu0 0.0
        %475 = vmatprep.subr.mxu0 0.0
        %476 = vmatpush2.msra.mxu0 0.0
        %477 = vmatprep.subr.mxu0 0.0
        %478 = vmatpush2.msra.mxu0 0.0
        %479 = vmatprep.subr.mxu0 0.0
        %480 = vmatpush2.msra.mxu0 0.0
        %481 = vmatprep.subr.mxu0 0.0
        %482 = vmatpush2.msra.mxu0 0.0
        %483 = vmatprep.subr.mxu0 0.0
        %484 = vmatpush2.msra.mxu0 0.0
        %485 = vmatprep.subr.mxu0 0.0
        %486 = vmatpush2.msra.mxu0 0.0
        %487 = vmatprep.subr.mxu0 0.0
        %488 = vmatpush2.msra.mxu0 0.0
        %489 = vmatprep.subr.mxu0 0.0
        %490 = vmatpush2.msra.mxu0 0.0
        %491 = vmatprep.subr.mxu0 0.0
        %492 = vmatpush2.msra.mxu0 0.0
        %493 = vmatprep.subr.mxu0 0.0
        %494 = vmatpush2.msra.mxu0 0.0
        %495 = vmatprep.subr.mxu0 0.0
        %496 = vmatpush2.msra.mxu0 0.0
        %497 = vmatprep.subr.mxu0 0.0
        %498 = vmatpush2.msra.mxu0 0.0
        %499 = vmatprep.subr.mxu0 0.0
        %500 = vmatpush2.msra.mxu0 0.0
        %501 = vmatprep.subr.mxu0 0.0
        %502 = vmatpush2.msra.mxu0 0.0
        %503 = vmatprep.subr.mxu0 0.0
        %504 = vmatpush2.msra.mxu0 0.0
        %505 = vmatprep.mubr.f32.mxu0 0.0
        %506 = vmatmul.mubr.f32.gmra.mxu0 %v439
        %v507 = vpop.f32.mrf.mxu0
        %v508 = vadd.f32 0.0, %v507
        %v509 = vpop.f32.mrf.mxu0
        %510 = vdwg.mxu0
        %512 = vrot.lane.b32.xlu0 %v434, 96
        %v513 = vpop.permute.xlu0 %512
        %v516 = vsel %vm437, %v252, 0
        %518 = vmatprep.subr.mxu0 0.0
        %519 = vmatpush1.msra.mxu0 0.0
        %520 = vmatprep.subr.mxu0 0.0
        %521 = vmatpush1.msra.mxu0 0.0
        %522 = vmatprep.subr.mxu0 0.0
        %523 = vmatpush1.msra.mxu0 0.0
        %524 = vmatprep.subr.mxu0 0.0
        %525 = vmatpush1.msra.mxu0 0.0
        %526 = vmatprep.subr.mxu0 0.0
        %527 = vmatpush1.msra.mxu0 0.0
        %528 = vmatprep.subr.mxu0 0.0
        %529 = vmatpush1.msra.mxu0 0.0
        %530 = vmatprep.subr.mxu0 0.0
        %531 = vmatpush1.msra.mxu0 0.0
        %532 = vmatprep.subr.mxu0 0.0
        %533 = vmatpush1.msra.mxu0 0.0
        %534 = vmatprep.subr.mxu0 0.0
        %535 = vmatpush1.msra.mxu0 0.0
        %536 = vmatprep.subr.mxu0 0.0
        %537 = vmatpush1.msra.mxu0 0.0
        %538 = vmatprep.subr.mxu0 0.0
        %539 = vmatpush1.msra.mxu0 0.0
        %540 = vmatprep.subr.mxu0 0.0
        %541 = vmatpush1.msra.mxu0 0.0
        %542 = vmatprep.subr.mxu0 0.0
        %543 = vmatpush1.msra.mxu0 0.0
        %544 = vmatprep.subr.mxu0 0.0
        %545 = vmatpush1.msra.mxu0 0.0
        %546 = vmatprep.subr.mxu0 0.0
        %547 = vmatpush1.msra.mxu0 0.0
        %548 = vmatprep.subr.mxu0 0.0
        %549 = vmatpush1.msra.mxu0 %v513
        %550 = vmatprep.subr.mxu0 0.0
        %551 = vmatpush2.msra.mxu0 0.0
        %552 = vmatprep.subr.mxu0 0.0
        %553 = vmatpush2.msra.mxu0 0.0
        %554 = vmatprep.subr.mxu0 0.0
        %555 = vmatpush2.msra.mxu0 0.0
        %556 = vmatprep.subr.mxu0 0.0
        %557 = vmatpush2.msra.mxu0 0.0
        %558 = vmatprep.subr.mxu0 0.0
        %559 = vmatpush2.msra.mxu0 0.0
        %560 = vmatprep.subr.mxu0 0.0
        %561 = vmatpush2.msra.mxu0 0.0
        %562 = vmatprep.subr.mxu0 0.0
        %563 = vmatpush2.msra.mxu0 0.0
        %564 = vmatprep.subr.mxu0 0.0
        %565 = vmatpush2.msra.mxu0 0.0
        %566 = vmatprep.subr.mxu0 0.0
        %567 = vmatpush2.msra.mxu0 0.0
        %568 = vmatprep.subr.mxu0 0.0
        %569 = vmatpush2.msra.mxu0 0.0
        %570 = vmatprep.subr.mxu0 0.0
        %571 = vmatpush2.msra.mxu0 0.0
        %572 = vmatprep.subr.mxu0 0.0
        %573 = vmatpush2.msra.mxu0 0.0
        %574 = vmatprep.subr.mxu0 0.0
        %575 = vmatpush2.msra.mxu0 0.0
        %576 = vmatprep.subr.mxu0 0.0
        %577 = vmatpush2.msra.mxu0 0.0
        %578 = vmatprep.subr.mxu0 0.0
        %579 = vmatpush2.msra.mxu0 0.0
        %580 = vmatprep.subr.mxu0 0.0
        %581 = vmatpush2.msra.mxu0 0.0
        %582 = vmatprep.mubr.f32.mxu0 0.0
        %583 = vmatmul.mubr.f32.gmra.mxu0 %v516
        %v584 = vpop.f32.mrf.mxu0
        %v585 = vadd.f32 0.0, %v584
        %v586 = vpop.f32.mrf.mxu0
        %587 = vdwg.mxu0
        %v589 = vsel %vm363, %v585, 0
        %591 = vmatprep.subr.mxu0 0.0
        %592 = vmatpush1.msra.mxu0 0.0
        %593 = vmatprep.subr.mxu0 0.0
        %594 = vmatpush1.msra.mxu0 0.0
        %595 = vmatprep.subr.mxu0 0.0
        %596 = vmatpush1.msra.mxu0 0.0
        %597 = vmatprep.subr.mxu0 0.0
        %598 = vmatpush1.msra.mxu0 0.0
        %599 = vmatprep.subr.mxu0 0.0
        %600 = vmatpush1.msra.mxu0 0.0
        %601 = vmatprep.subr.mxu0 0.0
        %602 = vmatpush1.msra.mxu0 0.0
        %603 = vmatprep.subr.mxu0 0.0
        %604 = vmatpush1.msra.mxu0 0.0
        %605 = vmatprep.subr.mxu0 0.0
        %606 = vmatpush1.msra.mxu0 0.0
        %607 = vmatprep.subr.mxu0 0.0
        %608 = vmatpush1.msra.mxu0 0.0
        %609 = vmatprep.subr.mxu0 0.0
        %610 = vmatpush1.msra.mxu0 0.0
        %611 = vmatprep.subr.mxu0 0.0
        %612 = vmatpush1.msra.mxu0 0.0
        %613 = vmatprep.subr.mxu0 0.0
        %614 = vmatpush1.msra.mxu0 0.0
        %615 = vmatprep.subr.mxu0 0.0
        %616 = vmatpush1.msra.mxu0 %v240
        %617 = vmatprep.subr.mxu0 0.0
        %618 = vmatpush1.msra.mxu0 %v239
        %619 = vmatprep.subr.mxu0 0.0
        %620 = vmatpush1.msra.mxu0 %v238
        %621 = vmatprep.subr.mxu0 0.0
        %622 = vmatpush1.msra.mxu0 %v237
        %623 = vmatprep.subr.mxu0 0.0
        %624 = vmatpush2.msra.mxu0 0.0
        %625 = vmatprep.subr.mxu0 0.0
        %626 = vmatpush2.msra.mxu0 0.0
        %627 = vmatprep.subr.mxu0 0.0
        %628 = vmatpush2.msra.mxu0 0.0
        %629 = vmatprep.subr.mxu0 0.0
        %630 = vmatpush2.msra.mxu0 0.0
        %631 = vmatprep.subr.mxu0 0.0
        %632 = vmatpush2.msra.mxu0 0.0
        %633 = vmatprep.subr.mxu0 0.0
        %634 = vmatpush2.msra.mxu0 0.0
        %635 = vmatprep.subr.mxu0 0.0
        %636 = vmatpush2.msra.mxu0 0.0
        %637 = vmatprep.subr.mxu0 0.0
        %638 = vmatpush2.msra.mxu0 0.0
        %639 = vmatprep.subr.mxu0 0.0
        %640 = vmatpush2.msra.mxu0 0.0
        %641 = vmatprep.subr.mxu0 0.0
        %642 = vmatpush2.msra.mxu0 0.0
        %643 = vmatprep.subr.mxu0 0.0
        %644 = vmatpush2.msra.mxu0 0.0
        %645 = vmatprep.subr.mxu0 0.0
        %646 = vmatpush2.msra.mxu0 0.0
        %647 = vmatprep.subr.mxu0 0.0
        %648 = vmatpush2.msra.mxu0 0.0
        %649 = vmatprep.subr.mxu0 0.0
        %650 = vmatpush2.msra.mxu0 0.0
        %651 = vmatprep.subr.mxu0 0.0
        %652 = vmatpush2.msra.mxu0 0.0
        %653 = vmatprep.subr.mxu0 0.0
        %654 = vmatpush2.msra.mxu0 0.0
        %655 = vmatprep.mubr.f32.mxu0 0.0
        %656 = vmatmul.mubr.f32.gmra.mxu0 %v589
        %v657 = vpop.f32.mrf.mxu0
        %v658 = vadd.f32 0.0, %v657
        %v659 = vpop.f32.mrf.mxu0
        %660 = vdwg.mxu0
        %v662 = vsel %vm363, %v508, 0
        %664 = vmatprep.subr.mxu0 0.0
        %665 = vmatpush1.msra.mxu0 0.0
        %666 = vmatprep.subr.mxu0 0.0
        %667 = vmatpush1.msra.mxu0 0.0
        %668 = vmatprep.subr.mxu0 0.0
        %669 = vmatpush1.msra.mxu0 0.0
        %670 = vmatprep.subr.mxu0 0.0
        %671 = vmatpush1.msra.mxu0 0.0
        %672 = vmatprep.subr.mxu0 0.0
        %673 = vmatpush1.msra.mxu0 0.0
        %674 = vmatprep.subr.mxu0 0.0
        %675 = vmatpush1.msra.mxu0 0.0
        %676 = vmatprep.subr.mxu0 0.0
        %677 = vmatpush1.msra.mxu0 0.0
        %678 = vmatprep.subr.mxu0 0.0
        %679 = vmatpush1.msra.mxu0 0.0
        %680 = vmatprep.subr.mxu0 0.0
        %681 = vmatpush1.msra.mxu0 0.0
        %682 = vmatprep.subr.mxu0 0.0
        %683 = vmatpush1.msra.mxu0 0.0
        %684 = vmatprep.subr.mxu0 0.0
        %685 = vmatpush1.msra.mxu0 0.0
        %686 = vmatprep.subr.mxu0 0.0
        %687 = vmatpush1.msra.mxu0 0.0
        %688 = vmatprep.subr.mxu0 0.0
        %689 = vmatpush1.msra.mxu0 %v236
        %690 = vmatprep.subr.mxu0 0.0
        %691 = vmatpush1.msra.mxu0 %v235
        %692 = vmatprep.subr.mxu0 0.0
        %693 = vmatpush1.msra.mxu0 %v234
        %694 = vmatprep.subr.mxu0 0.0
        %695 = vmatpush1.msra.mxu0 %v233
        %696 = vmatprep.subr.mxu0 0.0
        %697 = vmatpush2.msra.mxu0 0.0
        %698 = vmatprep.subr.mxu0 0.0
        %699 = vmatpush2.msra.mxu0 0.0
        %700 = vmatprep.subr.mxu0 0.0
        %701 = vmatpush2.msra.mxu0 0.0
        %702 = vmatprep.subr.mxu0 0.0
        %703 = vmatpush2.msra.mxu0 0.0
        %704 = vmatprep.subr.mxu0 0.0
        %705 = vmatpush2.msra.mxu0 0.0
        %706 = vmatprep.subr.mxu0 0.0
        %707 = vmatpush2.msra.mxu0 0.0
        %708 = vmatprep.subr.mxu0 0.0
        %709 = vmatpush2.msra.mxu0 0.0
        %710 = vmatprep.subr.mxu0 0.0
        %711 = vmatpush2.msra.mxu0 0.0
        %712 = vmatprep.subr.mxu0 0.0
        %713 = vmatpush2.msra.mxu0 0.0
        %714 = vmatprep.subr.mxu0 0.0
        %715 = vmatpush2.msra.mxu0 0.0
        %716 = vmatprep.subr.mxu0 0.0
        %717 = vmatpush2.msra.mxu0 0.0
        %718 = vmatprep.subr.mxu0 0.0
        %719 = vmatpush2.msra.mxu0 0.0
        %720 = vmatprep.subr.mxu0 0.0
        %721 = vmatpush2.msra.mxu0 0.0
        %722 = vmatprep.subr.mxu0 0.0
        %723 = vmatpush2.msra.mxu0 0.0
        %724 = vmatprep.subr.mxu0 0.0
        %725 = vmatpush2.msra.mxu0 0.0
        %726 = vmatprep.subr.mxu0 0.0
        %727 = vmatpush2.msra.mxu0 0.0
        %728 = vmatprep.mubr.f32.mxu0 0.0
        %729 = vmatmul.mubr.f32.gmra.mxu0 %v662
        %v730 = vpop.f32.mrf.mxu0
        %v731 = vadd.f32 %v658, %v730
        %v732 = vpop.f32.mrf.mxu0
        %733 = vdwg.mxu0
        %v734 = vlaneseq
        %v735 = vshrl.u32 %v734, 7
        %v736 = vsub.s32 3, %v735
        %v737 = vrot.slane %v249, %v736
        %v738 = vadd.f32 %v731, %v737
        %739 = vmatprep.subr.mxu0 0.0
        %740 = vmatpush1.msra.mxu0 0.0
        %741 = vmatprep.subr.mxu0 0.0
        %742 = vmatpush1.msra.mxu0 0.0
        %743 = vmatprep.subr.mxu0 0.0
        %744 = vmatpush1.msra.mxu0 0.0
        %745 = vmatprep.subr.mxu0 0.0
        %746 = vmatpush1.msra.mxu0 0.0
        %747 = vmatprep.subr.mxu0 0.0
        %748 = vmatpush1.msra.mxu0 0.0
        %749 = vmatprep.subr.mxu0 0.0
        %750 = vmatpush1.msra.mxu0 0.0
        %751 = vmatprep.subr.mxu0 0.0
        %752 = vmatpush1.msra.mxu0 0.0
        %753 = vmatprep.subr.mxu0 0.0
        %754 = vmatpush1.msra.mxu0 0.0
        %755 = vmatprep.subr.mxu0 0.0
        %756 = vmatpush1.msra.mxu0 0.0
        %757 = vmatprep.subr.mxu0 0.0
        %758 = vmatpush1.msra.mxu0 0.0
        %759 = vmatprep.subr.mxu0 0.0
        %760 = vmatpush1.msra.mxu0 0.0
        %761 = vmatprep.subr.mxu0 0.0
        %762 = vmatpush1.msra.mxu0 0.0
        %763 = vmatprep.subr.mxu0 0.0
        %764 = vmatpush1.msra.mxu0 %v244
        %765 = vmatprep.subr.mxu0 0.0
        %766 = vmatpush1.msra.mxu0 %v243
        %767 = vmatprep.subr.mxu0 0.0
        %768 = vmatpush1.msra.mxu0 %v242
        %769 = vmatprep.subr.mxu0 0.0
        %770 = vmatpush1.msra.mxu0 %v241
        %771 = vmatprep.subr.mxu0 0.0
        %772 = vmatpush2.msra.mxu0 0.0
        %773 = vmatprep.subr.mxu0 0.0
        %774 = vmatpush2.msra.mxu0 0.0
        %775 = vmatprep.subr.mxu0 0.0
        %776 = vmatpush2.msra.mxu0 0.0
        %777 = vmatprep.subr.mxu0 0.0
        %778 = vmatpush2.msra.mxu0 0.0
        %779 = vmatprep.subr.mxu0 0.0
        %780 = vmatpush2.msra.mxu0 0.0
        %781 = vmatprep.subr.mxu0 0.0
        %782 = vmatpush2.msra.mxu0 0.0
        %783 = vmatprep.subr.mxu0 0.0
        %784 = vmatpush2.msra.mxu0 0.0
        %785 = vmatprep.subr.mxu0 0.0
        %786 = vmatpush2.msra.mxu0 0.0
        %787 = vmatprep.subr.mxu0 0.0
        %788 = vmatpush2.msra.mxu0 0.0
        %789 = vmatprep.subr.mxu0 0.0
        %790 = vmatpush2.msra.mxu0 0.0
        %791 = vmatprep.subr.mxu0 0.0
        %792 = vmatpush2.msra.mxu0 0.0
        %793 = vmatprep.subr.mxu0 0.0
        %794 = vmatpush2.msra.mxu0 0.0
        %795 = vmatprep.subr.mxu0 0.0
        %796 = vmatpush2.msra.mxu0 0.0
        %797 = vmatprep.subr.mxu0 0.0
        %798 = vmatpush2.msra.mxu0 0.0
        %799 = vmatprep.subr.mxu0 0.0
        %800 = vmatpush2.msra.mxu0 0.0
        %801 = vmatprep.subr.mxu0 0.0
        %802 = vmatpush2.msra.mxu0 0.0
        %803 = vmatprep.mubr.f32.mxu0 0.0
        %804 = vmatmul.mubr.f32.gmra.mxu0 %v365
        %v805 = vpop.f32.mrf.mxu0
        %v806 = vadd.f32 0.0, %v805
        %v807 = vpop.f32.mrf.mxu0
        %808 = vdwg.mxu0
        %v809 = vadd.f32 %v738, %v806
        %v810 = vxor.u32 %v809, 2147483648
        %v811 = vmul.f32 %v810, 1.442695
        %v812 = vpow.pop %v811
        %v813 = vadd.f32 %v812, 1.0
        %v814 = vrcp.pop %v813
        %v815 = vmul.f32 1.0, %v814
        %v816 = vtanh.pop %v809
        %818 = vrot.lane.b32.xlu0 %v816, 96
        %v819 = vpop.permute.xlu0 %818
        %v821 = vsub.f32 %v356, %v819
        %v822 = vmul.f32 %v815, %v821
        %824 = vrot.lane.b32.xlu0 %v822, 32
        %v825 = vpop.permute.xlu0 %824
        %v827 = vadd.f32 %v816, %v825
        %829 = vrot.lane.b32.xlu0 %v827, 96
        %v830 = vpop.permute.xlu0 %829
        %v831 = vsel %vm363, %v830, 0
        %833 = vmatprep.subr.mxu0 0.0
        %834 = vmatpush1.msra.mxu0 0.0
        %835 = vmatprep.subr.mxu0 0.0
        %836 = vmatpush1.msra.mxu0 0.0
        %837 = vmatprep.subr.mxu0 0.0
        %838 = vmatpush1.msra.mxu0 0.0
        %839 = vmatprep.subr.mxu0 0.0
        %840 = vmatpush1.msra.mxu0 0.0
        %841 = vmatprep.subr.mxu0 0.0
        %842 = vmatpush1.msra.mxu0 0.0
        %843 = vmatprep.subr.mxu0 0.0
        %844 = vmatpush1.msra.mxu0 0.0
        %845 = vmatprep.subr.mxu0 0.0
        %846 = vmatpush1.msra.mxu0 0.0
        %847 = vmatprep.subr.mxu0 0.0
        %848 = vmatpush1.msra.mxu0 0.0
        %849 = vmatprep.subr.mxu0 0.0
        %850 = vmatpush1.msra.mxu0 0.0
        %851 = vmatprep.subr.mxu0 0.0
        %852 = vmatpush1.msra.mxu0 0.0
        %853 = vmatprep.subr.mxu0 0.0
        %854 = vmatpush1.msra.mxu0 0.0
        %855 = vmatprep.subr.mxu0 0.0
        %856 = vmatpush1.msra.mxu0 0.0
        %857 = vmatprep.subr.mxu0 0.0
        %858 = vmatpush1.msra.mxu0 %v248
        %859 = vmatprep.subr.mxu0 0.0
        %860 = vmatpush1.msra.mxu0 %v247
        %861 = vmatprep.subr.mxu0 0.0
        %862 = vmatpush1.msra.mxu0 %v246
        %863 = vmatprep.subr.mxu0 0.0
        %864 = vmatpush1.msra.mxu0 %v245
        %865 = vmatprep.subr.mxu0 0.0
        %866 = vmatpush2.msra.mxu0 0.0
        %867 = vmatprep.subr.mxu0 0.0
        %868 = vmatpush2.msra.mxu0 0.0
        %869 = vmatprep.subr.mxu0 0.0
        %870 = vmatpush2.msra.mxu0 0.0
        %871 = vmatprep.subr.mxu0 0.0
        %872 = vmatpush2.msra.mxu0 0.0
        %873 = vmatprep.subr.mxu0 0.0
        %874 = vmatpush2.msra.mxu0 0.0
        %875 = vmatprep.subr.mxu0 0.0
        %876 = vmatpush2.msra.mxu0 0.0
        %877 = vmatprep.subr.mxu0 0.0
        %878 = vmatpush2.msra.mxu0 0.0
        %879 = vmatprep.subr.mxu0 0.0
        %880 = vmatpush2.msra.mxu0 0.0
        %881 = vmatprep.subr.mxu0 0.0
        %882 = vmatpush2.msra.mxu0 0.0
        %883 = vmatprep.subr.mxu0 0.0
        %884 = vmatpush2.msra.mxu0 0.0
        %885 = vmatprep.subr.mxu0 0.0
        %886 = vmatpush2.msra.mxu0 0.0
        %887 = vmatprep.subr.mxu0 0.0
        %888 = vmatpush2.msra.mxu0 0.0
        %889 = vmatprep.subr.mxu0 0.0
        %890 = vmatpush2.msra.mxu0 0.0
        %891 = vmatprep.subr.mxu0 0.0
        %892 = vmatpush2.msra.mxu0 0.0
        %893 = vmatprep.subr.mxu0 0.0
        %894 = vmatpush2.msra.mxu0 0.0
        %895 = vmatprep.subr.mxu0 0.0
        %896 = vmatpush2.msra.mxu0 0.0
        %897 = vmatprep.mubr.f32.mxu0 0.0
        %898 = vmatmul.mubr.f32.gmra.mxu0 %v831
        %v899 = vpop.f32.mrf.mxu0
        %v900 = vadd.f32 0.0, %v899
        %v901 = vpop.f32.mrf.mxu0
        %902 = vdwg.mxu0
        %903 = vst.msk [vmem:[%s214] sm:$0xff] %vm253, %v900
        %s904 = sand.u32 %s125, 1
        %s905 = scalar_lea.sflag [#allocation3], %s904
        %s906 = sand.u32 %s125, 1
        %s907 = smul.addr %s906, 8
        %s908 = scalar_lea.vmem [#allocation2], %s907
        // Predicated region
        $region37: #{tpu_custom_call.1} parent=35 // pred_check
          %p909 = pneg %p135
        $region38: #{tpu_custom_call.1} parent=35 // pred_check_branch
          %911 = sbr.rel (%p909) target = $region40
        $region39: #{tpu_custom_call.1} parent=35 // pred_region
          %s913 = ssub.s32 128, 128
          %914 = vsyncadd %s905, %s913
          %s915 = smul.addr %s18, 128
          %s916 = scalar_lea.hbm %s4, %s915
          %s918 = sshll.u32 %s908, 4
          %s919 = int_to_ptr.vmem [resolvable:$true] %s918
          %921 = dma.vmem_to_hbm [thread:$0]  %s919, 128, %s916, %s905
        $region40: #{tpu_custom_call.1} parent=35 // pred_fallthru
          _
      $region36: #{tpu_custom_call.1} parent=5 // pred_fallthru
        _
      %p922 = scmp.le.s32.totalorder 2, %s13
      // Predicated region
      $region41: #{tpu_custom_call.1} parent=5 // pred_check
        %p923 = pneg %p922
      $region42: #{tpu_custom_call.1} parent=5 // pred_check_branch
        %925 = sbr.rel (%p923) target = $region44
      $region43: #{tpu_custom_call.1} parent=5 // pred_region
        %s926 = ssub.s32 %s13, 2
        // Predicated region
        $region45: #{tpu_custom_call.1} parent=43 // pred_check
          %p927 = pneg %p141
        $region46: #{tpu_custom_call.1} parent=43 // pred_check_branch
          %929 = sbr.rel (%p927) target = $region48
        $region47: #{tpu_custom_call.1} parent=43 // pred_region
          %s930 = sand.u32 %s126, 1
          %s931 = scalar_lea.sflag [#allocation3], %s930
          %s932 = sand.u32 %s126, 1
          %s933 = smul.addr %s932, 8
          %s934 = scalar_lea.vmem [#allocation2], %s933
          %935 = dma.done %s931, 128
        $region48: #{tpu_custom_call.1} parent=43 // pred_fallthru
          _
      $region44: #{tpu_custom_call.1} parent=5 // pred_fallthru
        _
    $region6: #{tpu_custom_call.1} parent=1 // loop_footer
      %s17 = sadd.s32 1, %s13
    $region7: #{tpu_custom_call.1} parent=1 // loop_footer_branch
      %12 = sbr.rel target = $region3
    $region8: #{tpu_custom_call.1} parent=1 // loop_exit
      _
    %936 = vsyncpa [#allocation3], 1
    %s937 = scalar_lea.sflag [#allocation3], 1
    %938 = vsyncpa %s937, 1

</llo_original>
